<compile_context>
chip_gen: v7x
topology: tpu7x:2x2x1
jax: 0.10.0
libtpu: 0.0.40
codegen_flags: <defaults>
</compile_context>

<pallas_src>
import functools
import math

import jax
import jax.numpy as jnp
from jax.experimental import pallas as pl
from jax.experimental.pallas import tpu as pltpu


def _rel_pos_window_copy_kernel(table_hbm, out_hbm, copy_sems, *,
                                src_start, num_stripes, stripe_rows):
    """out_hbm[r, :] = table_hbm[src_start + r, :] for r in [0, out_rows).

    `src_start` is sublane-aligned and dst starts at row 0, so every stripe's
    src/dst row offsets agree modulo the sublane tile -> full-tile DMA
    descriptors.  Stripes are issued back-to-back and waited on afterwards so
    multiple DMA streams are in flight concurrently.
    """
    total_rows = out_hbm.shape[0]
    copies = []
    for s in range(num_stripes):          # static Python loop (all ints)
        r0 = s * stripe_rows
        rows = min(stripe_rows, total_rows - r0)
        cp = pltpu.make_async_copy(
            table_hbm.at[pl.ds(src_start + r0, rows), :],
            out_hbm.at[pl.ds(r0, rows), :],
            copy_sems.at[s],
        )
        cp.start()
        copies.append(cp)
    for cp in copies:
        cp.wait()


def make_relative_position_table(embed_dim: int, max_seq_len: int,
                                 dtype=jnp.float32) -> jnp.ndarray:
    """Deterministic sinusoidal init, matching the PyTorch _init_embeddings.

    Works for even embed_dim (matches PyTorch exactly); odd embed_dim is
    handled by truncating div_term for the cos columns (the PyTorch code would
    raise a shape error in that case).  Prefer embed_dim % 128 == 0 so rows
    are lane-dense and every DMA descriptor is full-width.
    """
    positions = jnp.arange(-(max_seq_len - 1), max_seq_len,
                           dtype=jnp.float32)[:, None]             # (2L-1, 1)
    div_term = jnp.exp(jnp.arange(0, embed_dim, 2, dtype=jnp.float32)
                       * (-math.log(10000.0) / embed_dim))         # (ceil(D/2),)
    emb = jnp.zeros((2 * max_seq_len - 1, embed_dim), dtype=jnp.float32)
    emb = emb.at[:, 0::2].set(jnp.sin(positions * div_term))
    emb = emb.at[:, 1::2].set(jnp.cos(positions * div_term[: embed_dim // 2]))
    return emb.astype(dtype)


def relative_positional_encoding(table: jnp.ndarray, length: int,
                                 max_seq_len: int) -> jnp.ndarray:
    """Pallas-backed equivalent of RelativePositionalEncoding.forward(length)."""
    if length > max_seq_len:
        raise ValueError(
            f"Input sequence length ({length}) exceeds max_seq_len ({max_seq_len})")
    if length < 1:
        raise ValueError(f"length must be >= 1, got {length}")

    T, D = table.shape
    out_len = 2 * length - 1
    start = max_seq_len - length          # Python int -> static offset.
    itemsize = jnp.dtype(table.dtype).itemsize

    # --- sublane alignment: round the source start down to the sublane tile
    # and front-pad the copied window so src/dst offsets agree mod the tile.
    sublane = {4: 8, 2: 16, 1: 32}.get(itemsize, 8)
    pad = start % sublane
    src_start = start - pad               # aligned source row
    copy_rows = pad + out_len             # rows actually DMA'd (dst row 0 aligned)

    # --- stripe the copy into concurrent DMAs for large windows.
    bytes_total = copy_rows * D * itemsize
    MIN_STRIPE_BYTES = 1 << 20            # don't stripe tiny windows
    MAX_STRIPES = 8
    num_stripes = int(max(1, min(MAX_STRIPES, bytes_total // MIN_STRIPE_BYTES)))
    stripe_rows = -(-copy_rows // num_stripes)              # ceil div
    stripe_rows = -(-stripe_rows // sublane) * sublane      # keep stripes aligned
    num_stripes = -(-copy_rows // stripe_rows)              # recount after rounding

    kernel = functools.partial(
        _rel_pos_window_copy_kernel,
        src_start=src_start, num_stripes=num_stripes, stripe_rows=stripe_rows)

    out_padded = pl.pallas_call(
        kernel,
        out_shape=jax.ShapeDtypeStruct((copy_rows, D), table.dtype),
        # Raw HBM refs on both sides: only the window is read/written, nothing
        # is staged through VMEM (v7x-safe), HBM traffic = copy roofline.
        in_specs=[pl.BlockSpec(memory_space=pl.ANY)],
        out_specs=pl.BlockSpec(memory_space=pl.ANY),
        scratch_shapes=[pltpu.SemaphoreType.DMA((num_stripes,))],
        cost_estimate=pl.CostEstimate(
            flops=0, transcendentals=0,
            bytes_accessed=2 * copy_rows * D * itemsize),
    )(table)

    if pad == 0:
        return out_padded
    # Static slice: fused away by XLA when this feeds a downstream consumer.
    return out_padded[pad:pad + out_len]


if __name__ == "__main__":
    # Deterministic setup. (The module's parameters are a deterministic
    # sinusoidal init, so the PRNG key is not actually consumed.)
    _ = jax.random.PRNGKey(0)

    embed_dim = 128        # multiple of 128 -> lane-dense rows
    max_seq_len = 16

    # ---- f32 table (matches the PyTorch parameter dtype) -------------------
    table_f32 = make_relative_position_table(embed_dim, max_seq_len,
                                             dtype=jnp.float32)

    # length=8 -> start=8 (sublane-aligned path, pad=0)
    # length=5 -> start=11 (misaligned path, pad=3, front-padded aligned DMA)
    for length in (8, 5):
        out = relative_positional_encoding(table_f32, length, max_seq_len)
        out = jax.block_until_ready(out)
        start_pos = max_seq_len - length
        ref = table_f32[start_pos:start_pos + 2 * length - 1]
        assert out.shape == (2 * length - 1, embed_dim), out.shape
        assert out.dtype == table_f32.dtype, out.dtype
        assert jnp.array_equal(out, ref), f"f32 mismatch at length={length}"

    # ---- bf16 table (halves HBM bytes on this DMA-bound kernel) ------------
    table_bf16 = make_relative_position_table(embed_dim, max_seq_len,
                                              dtype=jnp.bfloat16)
    length = 8
    out = relative_positional_encoding(table_bf16, length, max_seq_len)
    out = jax.block_until_ready(out)
    start_pos = max_seq_len - length
    ref = table_bf16[start_pos:start_pos + 2 * length - 1]
    assert out.shape == (2 * length - 1, embed_dim), out.shape
    assert out.dtype == jnp.bfloat16, out.dtype
    assert jnp.array_equal(out, ref), "bf16 mismatch vs reference slice"

    print("KERNEL_OK")
</pallas_src>

<mosaic_0001>
module attributes {stable_mosaic.version = 11 : i64} {
  func.func @_rel_pos_window_copy_kernel(%arg0: memref<31x128xf32, #tpu.memory_space<any>>, %arg1: memref<15x128xf32, #tpu.memory_space<any>>, %arg2: memref<1x!tpu.dma_semaphore, #tpu.memory_space<semaphore_mem>>) attributes {dimension_semantics = [], scalar_prefetch = 0 : i64, scratch_operands = 1 : i64, tpu.core_type = #tpu.core_type<tc>} {
    %c0_i32 = arith.constant 0 : i32
    %c8_i32 = arith.constant 8 : i32
    %c0_i32_0 = arith.constant 0 : i32
    %0 = tpu.memref_slice %arg0[%c8_i32, %c0_i32_0] : memref<31x128xf32, #tpu.memory_space<any>> -> memref<15x128xf32, #tpu.memory_space<any>>
    %c0_i32_1 = arith.constant 0 : i32
    %c0_i32_2 = arith.constant 0 : i32
    %1 = tpu.memref_slice %arg1[%c0_i32_1, %c0_i32_2] : memref<15x128xf32, #tpu.memory_space<any>> -> memref<15x128xf32, #tpu.memory_space<any>>
    %2 = tpu.memref_slice %arg2[%c0_i32] : memref<1x!tpu.dma_semaphore, #tpu.memory_space<semaphore_mem>> -> memref<1x!tpu.dma_semaphore, #tpu.memory_space<semaphore_mem>>
    %3 = tpu.memref_squeeze %2 : memref<1x!tpu.dma_semaphore, #tpu.memory_space<semaphore_mem>> -> memref<!tpu.dma_semaphore, #tpu.memory_space<semaphore_mem>>
    tpu.enqueue_dma source(%0 : memref<15x128xf32, #tpu.memory_space<any>>) target(%1 : memref<15x128xf32, #tpu.memory_space<any>>) target_semaphore(%3 : memref<!tpu.dma_semaphore, #tpu.memory_space<semaphore_mem>>)
    %c0_i32_3 = arith.constant 0 : i32
    %c8_i32_4 = arith.constant 8 : i32
    %c0_i32_5 = arith.constant 0 : i32
    %4 = tpu.memref_slice %arg0[%c8_i32_4, %c0_i32_5] : memref<31x128xf32, #tpu.memory_space<any>> -> memref<15x128xf32, #tpu.memory_space<any>>
    %c0_i32_6 = arith.constant 0 : i32
    %c0_i32_7 = arith.constant 0 : i32
    %5 = tpu.memref_slice %arg1[%c0_i32_6, %c0_i32_7] : memref<15x128xf32, #tpu.memory_space<any>> -> memref<15x128xf32, #tpu.memory_space<any>>
    %6 = tpu.memref_slice %arg2[%c0_i32_3] : memref<1x!tpu.dma_semaphore, #tpu.memory_space<semaphore_mem>> -> memref<1x!tpu.dma_semaphore, #tpu.memory_space<semaphore_mem>>
    %7 = tpu.memref_squeeze %6 : memref<1x!tpu.dma_semaphore, #tpu.memory_space<semaphore_mem>> -> memref<!tpu.dma_semaphore, #tpu.memory_space<semaphore_mem>>
    tpu.wait_dma2 semaphore(%7 : memref<!tpu.dma_semaphore, #tpu.memory_space<semaphore_mem>>) src(%4 : memref<15x128xf32, #tpu.memory_space<any>>) dst(%5 : memref<15x128xf32, #tpu.memory_space<any>>)
    return
  }
}

</mosaic_0001>

<llo_original>
// kernel: tpu_custom_call.1
$region0: #{tpu_custom_call.1}
  #allocation0 [shape = 'u32[]', space=smem, size = 0x4, offset = 0x4, fixed_abs, tag = 'smem constant byte address 0x4 - core index']
  #allocation1 [shape = 'u32[144,128]{1,0:T(1,128)}', space=vmem, size = 0x12000, scoped, tag = 'internal scratch']
  #allocation2 [shape = 's32[1]{0}', space=sflag, size = 0x4, scoped, tag = 'scratch operand']
  #allocation3 [shape = 's32[]', space=sflag, size = 0x4, offset = 0, fixed_abs, tag = 'sflag constant byte address 0x0 - dummy sync flag']
  #allocation4 [shape = 'u32[0]{0}', space=smem, size = 0, offset = 0, fixed_abs, tag = 'smem constant byte address 0x0 - null']
  %s0 = inlined_call_operand.hbm [shape: f32[31,128], index: 0, kind: input, shape index: {}]
  %s1 = inlined_call_operand.hbm [shape: f32[15,128], index: 1, kind: output, shape index: {}]
  %s2 = sld [smem:[#allocation0]]
  $region2: #{tpu_custom_call.1} parent=0
    _
  %s4 = ssub.s32 1, %s2
  %s5 = scalar_select 0, %s4, %s2
  %s6 = scalar_lea.hbm %s0, 128
  %s8 = sshll.u32 1, 14
  %s9 = sxor.u32 4294967295, %s8
  %s12 = sshll.u32 3, 24
  %s13 = sxor.u32 4294967295, %s12
  %s14 = sand.u32 0, %s13
  %s16 = sor.u32 %s14, 0
  %19 = dma.general %s6, 240, %s1, [#allocation2], [#allocation3], [#allocation4], %s16, 0
  %s20 = smul.u32 15, 1
  %s21 = sshll.u32 %s20, 4
  %22 = dma.done [#allocation2], %s21
  %23 = vsyncmov [#allocation2]
  %s24 = vpop.sfrf %23
  %p25 = scmp.eq.s32.totalorder %s24, 0
  %p26 = pneg %p25
  %28 = shalt.err (%p26)

</llo_original>
